<compile_context>
chip_gen: v7x
topology: tpu7x:2x2x1
jax: 0.10.0
libtpu: 0.0.40
codegen_flags: <defaults>
</compile_context>

<pallas_src>
import functools
import math

import jax
import jax.numpy as jnp
import numpy as np
from jax import lax
from jax.experimental import pallas as pl
from jax.experimental.pallas import tpu as pltpu

LANES = 128  # vreg lane width; one column group per 128 lanes.


def _round_up(x, m):
    return (x + m - 1) // m * m


# ----------------------------------------------------------------------------
# Fused kernel: one MXU push for both heads, one lane-dense output slab.
#   y = h @ W_all + b_all                         -> [TB, 3*128]
#   mean   = y[:,   0:128]   (cols [0:A_c) valid)
#   stdpre = y[:, 128:256]   (cols [0:A_c) valid)
#   logits = y[:, 256:384]   (cols [0:A_d) valid; pads masked via avail==0)
#
# aux slab [TB, 3*128]:  eps | avail | gumbel  (zero-padded, lane-aligned)
#
# Continuous: std = sigmoid(stdpre)+1e-5; action = mean + std*eps;
#             logp = sum_a Normal(mean,std).log_prob(action)
# Discrete:   logits[avail==0] = -1e10; action = argmax(logits + gumbel);
#             logp = logits[action] - logsumexp(logits)
#
# Output slab [TB, 128]:
#   cols [0:A_c)  = continuous action
#   col  A_c      = continuous log_prob
#   col  A_c + 1  = discrete action (as float; exact for A_d <= 128)
#   col  A_c + 2  = discrete log_prob
# ----------------------------------------------------------------------------
def _fused_act_kernel(h_ref, w_ref, b_ref, aux_ref, out_ref, *, a_cont):
    # Single MXU push for both heads.
    y = jnp.dot(h_ref[...], w_ref[...], preferred_element_type=jnp.float32)
    # Bias add in-kernel: [1, 384] -> [TB, 384] broadcast is a trivial VPU op.
    y = y + b_ref[...]

    mean = y[:, 0 * LANES:1 * LANES]      # lane-aligned slices (free)
    stdp = y[:, 1 * LANES:2 * LANES]
    logits = y[:, 2 * LANES:3 * LANES]

    aux = aux_ref[...]
    eps = aux[:, 0 * LANES:1 * LANES]
    avail = aux[:, 1 * LANES:2 * LANES]
    gum = aux[:, 2 * LANES:3 * LANES]

    lane = lax.broadcasted_iota(jnp.int32, mean.shape, 1)   # [TB, 128]

    # ---- continuous (Box) head ---------------------------------------------
    std = jax.nn.sigmoid(stdp) + 1e-5
    action_c = mean + std * eps                    # eps padded with zeros
    # Normal log-prob (matches torch.distributions.Normal.log_prob).
    # TODO(synk): the original torch code references `normal` even when
    # deterministic=True (a latent NameError); here we evaluate the same
    # log-density at action == mean instead.
    var = std * std
    logp_el = (-((action_c - mean) ** 2) / (2.0 * var)
               - jnp.log(std)
               - 0.5 * math.log(2.0 * math.pi))
    logp_el = jnp.where(lane < a_cont, logp_el, 0.0)   # ignore padded columns
    logp_c = jnp.sum(logp_el, axis=-1, keepdims=True)  # [TB, 1]

    # ---- discrete (Categorical) head ---------------------------------------
    # avail is zero in the lane-pad columns, so this single mask also kills
    # the padded logits.
    logits = jnp.where(avail == 0.0, -1e10, logits)
    perturbed = logits + gum                       # gumbel padded with zeros
    pmax = jnp.max(perturbed, axis=-1, keepdims=True)
    first_hit = jnp.where(perturbed == pmax, lane, LANES)
    action_d = jnp.min(first_hit, axis=-1, keepdims=True)   # [TB, 1] int32
    m = jnp.max(logits, axis=-1, keepdims=True)
    lse = m + jnp.log(jnp.sum(jnp.exp(logits - m), axis=-1, keepdims=True))
    chosen = jnp.sum(jnp.where(lane == action_d, logits, 0.0),
                     axis=-1, keepdims=True)
    logp_d = chosen - lse                                    # [TB, 1]

    # ---- pack everything into one lane-dense slab --------------------------
    slab = jnp.where(lane < a_cont, action_c, 0.0)
    slab = jnp.where(lane == a_cont, logp_c, slab)
    slab = jnp.where(lane == a_cont + 1, action_d.astype(jnp.float32), slab)
    slab = jnp.where(lane == a_cont + 2, logp_d, slab)
    out_ref[...] = slab


# ----------------------------------------------------------------------------
# Parameter packing: concatenate the two heads' weights into one lane-aligned
# [H, 3*128] matrix (mean group | std group | logits group), zero-padded.
# ----------------------------------------------------------------------------
def pack_head_params(w_c, b_c, w_d, b_d):
    H = w_c.shape[0]
    a_c = w_c.shape[1] // 2
    a_d = w_d.shape[1]
    assert a_c + 3 <= LANES and a_d <= LANES
    w_all = jnp.zeros((H, 3 * LANES), jnp.float32)
    b_all = jnp.zeros((1, 3 * LANES), jnp.float32)
    w_all = w_all.at[:, 0:a_c].set(w_c[:, :a_c])                       # mean
    w_all = w_all.at[:, LANES:LANES + a_c].set(w_c[:, a_c:])           # std
    w_all = w_all.at[:, 2 * LANES:2 * LANES + a_d].set(w_d)            # logits
    b_all = b_all.at[:, 0:a_c].set(b_c[:, :a_c])
    b_all = b_all.at[:, LANES:LANES + a_c].set(b_c[:, a_c:])
    b_all = b_all.at[:, 2 * LANES:2 * LANES + a_d].set(b_d)
    return w_all, b_all


# ----------------------------------------------------------------------------
# Wrapper: pads B to a multiple of the batch tile, packs eps/avail/gumbel into
# one lane-aligned aux tensor, runs the fused kernel once, slices the packed
# output slab.
#   eps=None / gumbel=None -> deterministic mode (zeros).
#   avail=None             -> all actions available.
# Returns (action_cont, logp_cont, action_disc, logp_disc).
# ----------------------------------------------------------------------------
def transformer_act_forward(h, w_all, b_all, a_cont, a_disc,
                            eps=None, avail=None, gumbel=None, tb=512):
    B, H = h.shape
    TB = min(tb, _round_up(B, 8))       # multiple of 8; cap keeps VMEM safe
    Bp = _round_up(B, TB)

    h_p = h.astype(jnp.float32)
    if Bp != B:
        h_p = jnp.pad(h_p, ((0, Bp - B), (0, 0)))

    # aux slab: [eps | avail | gumbel], zero-padded, lane-aligned groups.
    aux = jnp.zeros((Bp, 3 * LANES), jnp.float32)
    if eps is not None:
        aux = aux.at[:B, 0:a_cont].set(eps.astype(jnp.float32))
    if avail is not None:
        aux = aux.at[:B, LANES:LANES + a_disc].set(avail.astype(jnp.float32))
    else:
        aux = aux.at[:B, LANES:LANES + a_disc].set(1.0)
    if gumbel is not None:
        aux = aux.at[:B, 2 * LANES:2 * LANES + a_disc].set(
            gumbel.astype(jnp.float32))

    kernel = functools.partial(_fused_act_kernel, a_cont=a_cont)
    slab = pl.pallas_call(
        kernel,
        grid=(Bp // TB,),
        in_specs=[
            pl.BlockSpec((TB, H), lambda i: (i, 0)),
            pl.BlockSpec((H, 3 * LANES), lambda i: (0, 0)),   # resident weight
            pl.BlockSpec((1, 3 * LANES), lambda i: (0, 0)),   # resident bias
            pl.BlockSpec((TB, 3 * LANES), lambda i: (i, 0)),  # aux slab
        ],
        out_specs=pl.BlockSpec((TB, LANES), lambda i: (i, 0)),
        out_shape=jax.ShapeDtypeStruct((Bp, LANES), jnp.float32),
        compiler_params=pltpu.CompilerParams(
            dimension_semantics=("parallel",)),   # shard B across TCs (v7x)
    )(h_p, w_all, b_all, aux)

    act_c = slab[:B, :a_cont]
    logp_c = slab[:B, a_cont:a_cont + 1]
    act_d = slab[:B, a_cont + 1:a_cont + 2].astype(jnp.int32)
    logp_d = slab[:B, a_cont + 2:a_cont + 3]
    return act_c, logp_c, act_d, logp_d


# ----------------------------------------------------------------------------
# Parameter setup (deterministic, mimicking orthogonal init with gain=0.01
# and zero bias, as in the PyTorch __init__).  Weight is pre-transposed to
# [hidden, out_dim] so the kernel does h @ W + b directly on the MXU.
# ----------------------------------------------------------------------------
def make_linear_params(key, hidden_size, out_dim, gain=0.01):
    m = jax.random.normal(key, (hidden_size, max(out_dim, 1)), dtype=jnp.float32)
    q, _ = jnp.linalg.qr(m)
    w = gain * q[:, :out_dim].astype(jnp.float32)
    b = jnp.zeros((1, out_dim), dtype=jnp.float32)
    return w, b


if __name__ == "__main__":
    key = jax.random.PRNGKey(0)
    k_h, k_wc, k_wd, k_eps, k_gum, k_avail = jax.random.split(key, 6)

    B = 8            # flattened batch * agents
    hidden = 32
    cont_dim = 3     # Box action dim
    disc_dim = 5     # Discrete action count

    hidden_states = jax.random.normal(k_h, (B, hidden), dtype=jnp.float32)

    w_c, b_c = make_linear_params(k_wc, hidden, cont_dim * 2)
    w_d, b_d = make_linear_params(k_wd, hidden, disc_dim)
    w_all, b_all = pack_head_params(w_c, b_c, w_d, b_d)

    eps = jax.random.normal(k_eps, (B, cont_dim), dtype=jnp.float32)
    avail = (jax.random.uniform(k_avail, (B, disc_dim)) > 0.2).astype(jnp.float32)
    avail = avail.at[:, 0].set(1.0)  # ensure at least one available action
    u = jax.random.uniform(k_gum, (B, disc_dim), minval=1e-6, maxval=1.0 - 1e-6)
    gumbel = -jnp.log(-jnp.log(u))

    # Stochastic forward (one fused pallas_call for both heads).
    act_c, logp_c, act_d, logp_d = transformer_act_forward(
        hidden_states, w_all, b_all, cont_dim, disc_dim,
        eps=eps, avail=avail, gumbel=gumbel)

    # Deterministic forward (eps/gumbel -> zeros).
    act_c_det, logp_c_det, act_d_det, logp_d_det = transformer_act_forward(
        hidden_states, w_all, b_all, cont_dim, disc_dim,
        eps=None, avail=avail, gumbel=None)

    outs = (act_c, logp_c, act_d, logp_d,
            act_c_det, logp_c_det, act_d_det, logp_d_det)
    for o in outs:
        jax.block_until_ready(o)

    # --- pure-JAX reference check (f32 highest-precision matmuls) -----------
    def ref_forward(h, eps_, gum_):
        out = jnp.dot(h, w_c, precision=lax.Precision.HIGHEST) + b_c
        mean, stdp = out[:, :cont_dim], out[:, cont_dim:]
        std = jax.nn.sigmoid(stdp) + 1e-5
        a = mean + std * eps_
        lp = (-((a - mean) ** 2) / (2 * std * std) - jnp.log(std)
              - 0.5 * math.log(2 * math.pi)).sum(-1, keepdims=True)
        logits = jnp.dot(h, w_d, precision=lax.Precision.HIGHEST) + b_d
        logits = jnp.where(avail == 0.0, -1e10, logits)
        ad = jnp.argmax(logits + gum_, axis=-1, keepdims=True)
        lsm = logits - jax.scipy.special.logsumexp(logits, axis=-1, keepdims=True)
        lpd = jnp.take_along_axis(lsm, ad, axis=-1)
        return a, lp, ad.astype(jnp.int32), lpd

    r_ac, r_lpc, r_ad, r_lpd = ref_forward(hidden_states, eps, gumbel)
    np.testing.assert_allclose(np.asarray(act_c), np.asarray(r_ac),
                               rtol=2e-3, atol=2e-3)
    np.testing.assert_allclose(np.asarray(logp_c), np.asarray(r_lpc),
                               rtol=2e-3, atol=2e-3)
    np.testing.assert_array_equal(np.asarray(act_d), np.asarray(r_ad))
    np.testing.assert_allclose(np.asarray(logp_d), np.asarray(r_lpd),
                               rtol=2e-3, atol=2e-3)

    r_ac, r_lpc, r_ad, r_lpd = ref_forward(
        hidden_states, jnp.zeros((B, cont_dim)), jnp.zeros((B, disc_dim)))
    np.testing.assert_allclose(np.asarray(act_c_det), np.asarray(r_ac),
                               rtol=2e-3, atol=2e-3)
    np.testing.assert_array_equal(np.asarray(act_d_det), np.asarray(r_ad))

    assert act_c.shape == (B, cont_dim) and logp_c.shape == (B, 1)
    assert act_d.shape == (B, 1) and logp_d.shape == (B, 1)
    assert act_d.dtype == jnp.int32

    print("KERNEL_OK")
</pallas_src>

<mosaic_0001>
module attributes {stable_mosaic.version = 11 : i64} {
  func.func @_fused_act_kernel(%arg0: i32, %arg1: memref<8x32xf32, #tpu.memory_space<vmem>>, %arg2: memref<32x384xf32, #tpu.memory_space<vmem>>, %arg3: memref<1x384xf32, #tpu.memory_space<vmem>>, %arg4: memref<8x384xf32, #tpu.memory_space<vmem>>, %arg5: memref<8x128xf32, #tpu.memory_space<vmem>>) attributes {dimension_semantics = [#tpu.dimension_semantics<parallel>], iteration_bounds = array<i64: 1>, scalar_prefetch = 0 : i64, scratch_operands = 0 : i64, tpu.core_type = #tpu.core_type<tc>, window_params = [{transform_indices = @transform_0, window_bounds = array<i64: 8, 32>}, {pipeline_mode = #tpu.pipeline_mode<synchronous>, transform_indices = @transform_1, window_bounds = array<i64: 32, 384>}, {pipeline_mode = #tpu.pipeline_mode<synchronous>, transform_indices = @transform_2, window_bounds = array<i64: 1, 384>}, {transform_indices = @transform_3, window_bounds = array<i64: 8, 384>}, {transform_indices = @transform_4, window_bounds = array<i64: 8, 128>}]} {
    %c0 = arith.constant 0 : index
    %c0_0 = arith.constant 0 : index
    %0 = vector.load %arg1[%c0, %c0_0] : memref<8x32xf32, #tpu.memory_space<vmem>>, vector<8x32xf32>
    %c0_1 = arith.constant 0 : index
    %c0_2 = arith.constant 0 : index
    %1 = vector.load %arg2[%c0_1, %c0_2] : memref<32x384xf32, #tpu.memory_space<vmem>>, vector<32x384xf32>
    %cst = arith.constant dense<0.000000e+00> : vector<8x384xf32>
    %2 = tpu.matmul %0, %1, %cst {dimension_numbers = #tpu.dot_dimension_numbers<[1], [0], [0], [1], [0, 0, 1, 1], [], []>} : vector<8x32xf32>, vector<32x384xf32>, vector<8x384xf32> -> vector<8x384xf32>
    %c0_3 = arith.constant 0 : index
    %c0_4 = arith.constant 0 : index
    %3 = vector.load %arg3[%c0_3, %c0_4] : memref<1x384xf32, #tpu.memory_space<vmem>>, vector<1x384xf32>
    %4 = vector.broadcast %3 : vector<1x384xf32> to vector<8x384xf32>
    %5 = arith.addf %2, %4 : vector<8x384xf32>
    %6 = vector.extract_strided_slice %5 {offsets = [0, 0], sizes = [8, 128], strides = [1, 1]} : vector<8x384xf32> to vector<8x128xf32>
    %7 = vector.extract_strided_slice %5 {offsets = [0, 128], sizes = [8, 128], strides = [1, 1]} : vector<8x384xf32> to vector<8x128xf32>
    %8 = vector.extract_strided_slice %5 {offsets = [0, 256], sizes = [8, 128], strides = [1, 1]} : vector<8x384xf32> to vector<8x128xf32>
    %c0_5 = arith.constant 0 : index
    %c0_6 = arith.constant 0 : index
    %9 = vector.load %arg4[%c0_5, %c0_6] : memref<8x384xf32, #tpu.memory_space<vmem>>, vector<8x384xf32>
    %10 = vector.extract_strided_slice %9 {offsets = [0, 0], sizes = [8, 128], strides = [1, 1]} : vector<8x384xf32> to vector<8x128xf32>
    %11 = vector.extract_strided_slice %9 {offsets = [0, 128], sizes = [8, 128], strides = [1, 1]} : vector<8x384xf32> to vector<8x128xf32>
    %12 = vector.extract_strided_slice %9 {offsets = [0, 256], sizes = [8, 128], strides = [1, 1]} : vector<8x384xf32> to vector<8x128xf32>
    %13 = tpu.iota {dimensions = array<i32: 1>} : vector<8x128xi32>
    %14 = arith.negf %7 : vector<8x128xf32>
    %15 = math.exp %14 : vector<8x128xf32>
    %cst_7 = arith.constant 1.000000e+00 : f32
    %16 = vector.broadcast %cst_7 : f32 to vector<8x128xf32>
    %17 = arith.addf %16, %15 : vector<8x128xf32>
    %18 = arith.divf %16, %17 : vector<8x128xf32>
    %cst_8 = arith.constant 9.99999974E-6 : f32
    %19 = vector.broadcast %cst_8 : f32 to vector<8x128xf32>
    %20 = arith.addf %18, %19 : vector<8x128xf32>
    %21 = arith.mulf %20, %10 : vector<8x128xf32>
    %22 = arith.addf %6, %21 : vector<8x128xf32>
    %23 = arith.mulf %20, %20 : vector<8x128xf32>
    %24 = arith.subf %22, %6 : vector<8x128xf32>
    %25 = arith.mulf %24, %24 : vector<8x128xf32>
    %cst_9 = arith.constant 0.000000e+00 : f32
    %26 = vector.broadcast %cst_9 : f32 to vector<8x128xf32>
    %27 = arith.subf %26, %25 : vector<8x128xf32>
    %cst_10 = arith.constant 2.000000e+00 : f32
    %28 = vector.broadcast %cst_10 : f32 to vector<8x128xf32>
    %29 = arith.mulf %28, %23 : vector<8x128xf32>
    %30 = arith.divf %27, %29 : vector<8x128xf32>
    %31 = math.log %20 : vector<8x128xf32>
    %32 = arith.subf %30, %31 : vector<8x128xf32>
    %cst_11 = arith.constant 0.918938517 : f32
    %33 = vector.broadcast %cst_11 : f32 to vector<8x128xf32>
    %34 = arith.subf %32, %33 : vector<8x128xf32>
    %c3_i32 = arith.constant 3 : i32
    %35 = vector.broadcast %c3_i32 : i32 to vector<8x128xi32>
    %36 = arith.cmpi slt, %13, %35 : vector<8x128xi32>
    %cst_12 = arith.constant 0.000000e+00 : f32
    %37 = vector.broadcast %cst_12 : f32 to vector<8x128xf32>
    %38 = arith.select %36, %34, %37 : vector<8x128xi1>, vector<8x128xf32>
    %cst_13 = arith.constant dense<0.000000e+00> : vector<8xf32>
    %39 = vector.multi_reduction <add>, %38, %cst_13 [1] : vector<8x128xf32> to vector<8xf32>
    %40 = vector.shape_cast %39 : vector<8xf32> to vector<8x1xf32>
    %cst_14 = arith.constant 0.000000e+00 : f32
    %41 = vector.broadcast %cst_14 : f32 to vector<8x128xf32>
    %42 = arith.cmpf oeq, %11, %41 : vector<8x128xf32>
    %cst_15 = arith.constant -1.000000e+10 : f32
    %43 = vector.broadcast %cst_15 : f32 to vector<8x128xf32>
    %44 = arith.select %42, %43, %8 : vector<8x128xi1>, vector<8x128xf32>
    %45 = arith.addf %44, %12 : vector<8x128xf32>
    %cst_16 = arith.constant dense<0xFF800000> : vector<8xf32>
    %46 = vector.multi_reduction <maximumf>, %45, %cst_16 [1] : vector<8x128xf32> to vector<8xf32>
    %47 = vector.shape_cast %46 : vector<8xf32> to vector<8x1xf32>
    %48 = vector.broadcast %47 : vector<8x1xf32> to vector<8x128xf32>
    %49 = arith.cmpf oeq, %45, %48 : vector<8x128xf32>
    %c128_i32 = arith.constant 128 : i32
    %50 = vector.broadcast %c128_i32 : i32 to vector<8x128xi32>
    %51 = arith.select %49, %13, %50 : vector<8x128xi1>, vector<8x128xi32>
    %cst_17 = arith.constant dense<2147483647> : vector<8xi32>
    %52 = vector.multi_reduction <minsi>, %51, %cst_17 [1] : vector<8x128xi32> to vector<8xi32>
    %53 = vector.shape_cast %52 : vector<8xi32> to vector<8x1xi32>
    %cst_18 = arith.constant dense<0xFF800000> : vector<8xf32>
    %54 = vector.multi_reduction <maximumf>, %44, %cst_18 [1] : vector<8x128xf32> to vector<8xf32>
    %55 = vector.shape_cast %54 : vector<8xf32> to vector<8x1xf32>
    %56 = vector.broadcast %55 : vector<8x1xf32> to vector<8x128xf32>
    %57 = arith.subf %44, %56 : vector<8x128xf32>
    %58 = math.exp %57 : vector<8x128xf32>
    %cst_19 = arith.constant dense<0.000000e+00> : vector<8xf32>
    %59 = vector.multi_reduction <add>, %58, %cst_19 [1] : vector<8x128xf32> to vector<8xf32>
    %60 = vector.shape_cast %59 : vector<8xf32> to vector<8x1xf32>
    %61 = math.log %60 : vector<8x1xf32>
    %62 = arith.addf %55, %61 : vector<8x1xf32>
    %63 = vector.broadcast %53 : vector<8x1xi32> to vector<8x128xi32>
    %64 = arith.cmpi eq, %13, %63 : vector<8x128xi32>
    %cst_20 = arith.constant 0.000000e+00 : f32
    %65 = vector.broadcast %cst_20 : f32 to vector<8x128xf32>
    %66 = arith.select %64, %44, %65 : vector<8x128xi1>, vector<8x128xf32>
    %cst_21 = arith.constant dense<0.000000e+00> : vector<8xf32>
    %67 = vector.multi_reduction <add>, %66, %cst_21 [1] : vector<8x128xf32> to vector<8xf32>
    %68 = vector.shape_cast %67 : vector<8xf32> to vector<8x1xf32>
    %69 = arith.subf %68, %62 : vector<8x1xf32>
    %c3_i32_22 = arith.constant 3 : i32
    %70 = vector.broadcast %c3_i32_22 : i32 to vector<8x128xi32>
    %71 = arith.cmpi slt, %13, %70 : vector<8x128xi32>
    %cst_23 = arith.constant 0.000000e+00 : f32
    %72 = vector.broadcast %cst_23 : f32 to vector<8x128xf32>
    %73 = arith.select %71, %22, %72 : vector<8x128xi1>, vector<8x128xf32>
    %c3_i32_24 = arith.constant 3 : i32
    %74 = vector.broadcast %c3_i32_24 : i32 to vector<8x128xi32>
    %75 = arith.cmpi eq, %13, %74 : vector<8x128xi32>
    %76 = vector.shape_cast %40 : vector<8x1xf32> to vector<8x1xf32>
    %77 = vector.broadcast %76 : vector<8x1xf32> to vector<8x128xf32>
    %78 = arith.select %75, %77, %73 : vector<8x128xi1>, vector<8x128xf32>
    %c4_i32 = arith.constant 4 : i32
    %79 = vector.broadcast %c4_i32 : i32 to vector<8x128xi32>
    %80 = arith.cmpi eq, %13, %79 : vector<8x128xi32>
    %81 = arith.sitofp %53 : vector<8x1xi32> to vector<8x1xf32>
    %82 = vector.shape_cast %81 : vector<8x1xf32> to vector<8x1xf32>
    %83 = vector.broadcast %82 : vector<8x1xf32> to vector<8x128xf32>
    %84 = arith.select %80, %83, %78 : vector<8x128xi1>, vector<8x128xf32>
    %c5_i32 = arith.constant 5 : i32
    %85 = vector.broadcast %c5_i32 : i32 to vector<8x128xi32>
    %86 = arith.cmpi eq, %13, %85 : vector<8x128xi32>
    %87 = vector.shape_cast %69 : vector<8x1xf32> to vector<8x1xf32>
    %88 = vector.broadcast %87 : vector<8x1xf32> to vector<8x128xf32>
    %89 = arith.select %86, %88, %84 : vector<8x128xi1>, vector<8x128xf32>
    %c0_25 = arith.constant 0 : index
    %c0_26 = arith.constant 0 : index
    %90 = vector.load %arg5[%c0_25, %c0_26] : memref<8x128xf32, #tpu.memory_space<vmem>>, vector<8x128xf32>
    tpu.vector_store %arg5[%c0_25, %c0_26], %89 {strides = array<i32>} : memref<8x128xf32, #tpu.memory_space<vmem>>, vector<8x128xf32>,
    return
  }
  func.func @transform_0(%arg0: i32) -> (i32, i32) {
    %c0_i32 = arith.constant 0 : i32
    %c0_i32_0 = arith.constant 0 : i32
    return %arg0, %c0_i32 : i32, i32
  }
  func.func @transform_1(%arg0: i32) -> (i32, i32) {
    %c0_i32 = arith.constant 0 : i32
    %c0_i32_0 = arith.constant 0 : i32
    %c0_i32_1 = arith.constant 0 : i32
    return %c0_i32, %c0_i32_0 : i32, i32
  }
  func.func @transform_2(%arg0: i32) -> (i32, i32) {
    %c0_i32 = arith.constant 0 : i32
    %c0_i32_0 = arith.constant 0 : i32
    %c0_i32_1 = arith.constant 0 : i32
    return %c0_i32, %c0_i32_0 : i32, i32
  }
  func.func @transform_3(%arg0: i32) -> (i32, i32) {
    %c0_i32 = arith.constant 0 : i32
    %c0_i32_0 = arith.constant 0 : i32
    return %arg0, %c0_i32 : i32, i32
  }
  func.func @transform_4(%arg0: i32) -> (i32, i32) {
    %c0_i32 = arith.constant 0 : i32
    %c0_i32_0 = arith.constant 0 : i32
    return %arg0, %c0_i32 : i32, i32
  }
}

</mosaic_0001>

<llo_original>
// kernel: tpu_custom_call.1
$region0: #{tpu_custom_call.1}
  #allocation0 [shape = 'u32[]', space=smem, size = 0x4, offset = 0x4, fixed_abs, tag = 'smem constant byte address 0x4 - core index']
  #allocation1 [shape = 'u32[144,128]{1,0:T(1,128)}', space=vmem, size = 0x12000, scoped, tag = 'internal scratch']
  %s0 = inlined_call_operand.hbm [shape: f32[8,32], index: 0, kind: input, shape index: {}]
  %s1 = inlined_call_operand.hbm [shape: f32[32,384], index: 1, kind: input, shape index: {}]
  %s2 = inlined_call_operand.vmem [shape: f32[1,384], index: 2, kind: input, shape index: {}]
  %s3 = inlined_call_operand.hbm [shape: f32[8,384], index: 3, kind: input, shape index: {}]
  %s4 = inlined_call_operand.hbm [shape: f32[8,128], index: 4, kind: output, shape index: {}]
  %s5 = sld [smem:[#allocation0]]
  $region38: #{tpu_custom_call.1} parent=0
    _
  %s7 = ssub.s32 1, %s5
  %s8 = scalar_select 0, %s7, %s5
  $region1: #{tpu_custom_call.1} parent=0
    #allocation2 [shape = 'u8[4096]{0}', space=vmem, size = 0x1000, scoped, tag = 'input window, operand 0, single buffered']
    #allocation3 [shape = 's32[1]{0}', space=sflag, size = 0x4, scoped, tag = 'scoped memory for tpu_custom_call.1']
    #allocation4 [shape = 's32[1]{0}', space=sflag, size = 0x4, scoped, tag = 'scoped memory for tpu_custom_call.1']
    #allocation5 [shape = 'u8[49152]{0}', space=vmem, size = 0xc000, scoped, tag = 'input window, operand 1, single buffered']
    #allocation6 [shape = 's32[1]{0}', space=sflag, size = 0x4, scoped, tag = 'scoped memory for tpu_custom_call.1']
    #allocation7 [shape = 'u8[12288]{0}', space=vmem, size = 0x3000, scoped, tag = 'input window, operand 3, single buffered']
    #allocation8 [shape = 'u8[4096]{0}', space=vmem, size = 0x1000, scoped, tag = 'output window, operand 0, single buffered']
    %9 = vsyncpa [#allocation3], 0
    %10 = vsyncpa [#allocation6], 0
    %11 = vsyncpa [#allocation4], 0
    // Predicated region
    $region2: #{tpu_custom_call.1} parent=1 // pred_check
      _
    $region3: #{tpu_custom_call.1} parent=1 // pred_check_branch
      %13 = sbr.rel (0) target = $region5
    $region4: #{tpu_custom_call.1} parent=1 // pred_region
      %s15 = ssub.s32 128, 128
      %16 = vsyncadd [#allocation3], %s15
      %s18 = sshll.u32 [#allocation2], 4
      %s19 = int_to_ptr.vmem [resolvable:$true] %s18
      %21 = dma.hbm_to_vmem [thread:$0]  %s0, 128, %s19, [#allocation3]
    $region5: #{tpu_custom_call.1} parent=1 // pred_fallthru
      _
    // Predicated region
    $region6: #{tpu_custom_call.1} parent=1 // pred_check
      _
    $region7: #{tpu_custom_call.1} parent=1 // pred_check_branch
      %23 = sbr.rel (0) target = $region9
    $region8: #{tpu_custom_call.1} parent=1 // pred_region
      %s25 = ssub.s32 1536, 1536
      %26 = vsyncadd [#allocation6], %s25
      %s27 = sshll.u32 [#allocation5], 4
      %s28 = int_to_ptr.vmem [resolvable:$true] %s27
      %33 = dma.hbm_to_vmem [thread:$0]  %s1, 1536, %s28, [#allocation6], 384, 384, 24
    $region9: #{tpu_custom_call.1} parent=1 // pred_fallthru
      _
    // Predicated region
    $region10: #{tpu_custom_call.1} parent=1 // pred_check
      _
    $region11: #{tpu_custom_call.1} parent=1 // pred_check_branch
      %35 = sbr.rel (0) target = $region13
    $region12: #{tpu_custom_call.1} parent=1 // pred_region
      _
    $region13: #{tpu_custom_call.1} parent=1 // pred_fallthru
      _
    // Predicated region
    $region14: #{tpu_custom_call.1} parent=1 // pred_check
      _
    $region15: #{tpu_custom_call.1} parent=1 // pred_check_branch
      %37 = sbr.rel (0) target = $region17
    $region16: #{tpu_custom_call.1} parent=1 // pred_region
      %s39 = ssub.s32 384, 384
      %40 = vsyncadd [#allocation6], %s39
      %s42 = sshll.u32 [#allocation7], 4
      %s43 = int_to_ptr.vmem [resolvable:$true] %s42
      %45 = dma.hbm_to_vmem [thread:$0]  %s3, 384, %s43, [#allocation6]
    $region17: #{tpu_custom_call.1} parent=1 // pred_fallthru
      _
    // Predicated region
    $region18: #{tpu_custom_call.1} parent=1 // pred_check
      _
    $region19: #{tpu_custom_call.1} parent=1 // pred_check_branch
      %47 = sbr.rel (0) target = $region21
    $region20: #{tpu_custom_call.1} parent=1 // pred_region
      %48 = dma.done [#allocation3], 128
    $region21: #{tpu_custom_call.1} parent=1 // pred_fallthru
      _
    // Predicated region
    $region22: #{tpu_custom_call.1} parent=1 // pred_check
      _
    $region23: #{tpu_custom_call.1} parent=1 // pred_check_branch
      %50 = sbr.rel (0) target = $region25
    $region24: #{tpu_custom_call.1} parent=1 // pred_region
      %51 = dma.done [#allocation6], 1536
    $region25: #{tpu_custom_call.1} parent=1 // pred_fallthru
      _
    // Predicated region
    $region26: #{tpu_custom_call.1} parent=1 // pred_check
      _
    $region27: #{tpu_custom_call.1} parent=1 // pred_check_branch
      %53 = sbr.rel (0) target = $region29
    $region28: #{tpu_custom_call.1} parent=1 // pred_region
      %54 = dma.done [#allocation6], 384
    $region29: #{tpu_custom_call.1} parent=1 // pred_fallthru
      _
    %v55 = vld [vmem:[#allocation2] sm:$0xff]
    %v56 = vld [vmem:[#allocation5] sm:$0xff]
    %v57 = vld [vmem:[#allocation5 + $0x8] sm:$0xff]
    %v58 = vld [vmem:[#allocation5 + $0x10] sm:$0xff]
    %v59 = vld [vmem:[#allocation5 + $0x18] sm:$0xff]
    %v60 = vld [vmem:[#allocation5 + $0x20] sm:$0xff]
    %v61 = vld [vmem:[#allocation5 + $0x28] sm:$0xff]
    %v62 = vld [vmem:[#allocation5 + $0x30] sm:$0xff]
    %v63 = vld [vmem:[#allocation5 + $0x38] sm:$0xff]
    %v64 = vld [vmem:[#allocation5 + $0x40] sm:$0xff]
    %v65 = vld [vmem:[#allocation5 + $0x48] sm:$0xff]
    %v66 = vld [vmem:[#allocation5 + $0x50] sm:$0xff]
    %v67 = vld [vmem:[#allocation5 + $0x58] sm:$0xff]
    %v68 = vld [vmem:[%s2] sm:$0x7]
    %v70 = vlaneseq
    %v71 = vshrl.u32 %v70, 7
    %v72 = vsub.s32 0, %v71
    %v73 = vrot.slane %v68, %v72
    %v74 = vlaneseq
    %v75 = vshrl.u32 %v74, 7
    %v76 = vsub.s32 1, %v75
    %v77 = vrot.slane %v68, %v76
    %v78 = vlaneseq
    %v79 = vshrl.u32 %v78, 7
    %v80 = vsub.s32 2, %v79
    %v81 = vrot.slane %v68, %v80
    %vm85 = vcmask 261120
    %v87 = vsel %vm85, %v55, 0
    %89 = vmatprep.subr.mxu0 %v57
    %90 = vmatpush1.msra.mxu0 %v56
    %91 = vmatprep.subr.mxu0 %v60
    %92 = vmatpush1.msra.mxu0 %v59
    %93 = vmatprep.subr.mxu0 %v63
    %94 = vmatpush1.msra.mxu0 %v62
    %95 = vmatprep.subr.mxu0 %v66
    %96 = vmatpush1.msra.mxu0 %v65
    %97 = vmatprep.subr.mxu0 0.0
    %98 = vmatpush1.msra.mxu0 0.0
    %99 = vmatprep.subr.mxu0 0.0
    %100 = vmatpush1.msra.mxu0 0.0
    %101 = vmatprep.subr.mxu0 0.0
    %102 = vmatpush1.msra.mxu0 0.0
    %103 = vmatprep.subr.mxu0 0.0
    %104 = vmatpush1.msra.mxu0 0.0
    %105 = vmatprep.subr.mxu0 0.0
    %106 = vmatpush1.msra.mxu0 0.0
    %107 = vmatprep.subr.mxu0 0.0
    %108 = vmatpush1.msra.mxu0 0.0
    %109 = vmatprep.subr.mxu0 0.0
    %110 = vmatpush1.msra.mxu0 0.0
    %111 = vmatprep.subr.mxu0 0.0
    %112 = vmatpush1.msra.mxu0 0.0
    %113 = vmatprep.subr.mxu0 0.0
    %114 = vmatpush1.msra.mxu0 0.0
    %115 = vmatprep.subr.mxu0 0.0
    %116 = vmatpush1.msra.mxu0 0.0
    %117 = vmatprep.subr.mxu0 0.0
    %118 = vmatpush1.msra.mxu0 0.0
    %119 = vmatprep.subr.mxu0 0.0
    %120 = vmatpush1.msra.mxu0 0.0
    %121 = vmatprep.subr.mxu0 0.0
    %122 = vmatpush1.msra.mxu0 0.0
    %123 = vmatprep.subr.mxu0 0.0
    %124 = vmatpush1.msra.mxu0 0.0
    %125 = vmatprep.subr.mxu0 0.0
    %126 = vmatpush1.msra.mxu0 0.0
    %127 = vmatprep.subr.mxu0 0.0
    %128 = vmatpush1.msra.mxu0 0.0
    %129 = vmatprep.subr.mxu0 0.0
    %130 = vmatpush1.msra.mxu0 0.0
    %131 = vmatprep.subr.mxu0 0.0
    %132 = vmatpush1.msra.mxu0 0.0
    %133 = vmatprep.subr.mxu0 0.0
    %134 = vmatpush1.msra.mxu0 0.0
    %135 = vmatprep.subr.mxu0 0.0
    %136 = vmatpush1.msra.mxu0 0.0
    %137 = vmatprep.subr.mxu0 0.0
    %138 = vmatpush1.msra.mxu0 0.0
    %139 = vmatprep.subr.mxu0 0.0
    %140 = vmatpush1.msra.mxu0 0.0
    %141 = vmatprep.subr.mxu0 0.0
    %142 = vmatpush1.msra.mxu0 0.0
    %143 = vmatprep.subr.mxu0 0.0
    %144 = vmatpush1.msra.mxu0 0.0
    %145 = vmatprep.subr.mxu0 0.0
    %146 = vmatpush1.msra.mxu0 0.0
    %147 = vmatprep.subr.mxu0 0.0
    %148 = vmatpush1.msra.mxu0 0.0
    %149 = vmatprep.subr.mxu0 0.0
    %150 = vmatpush1.msra.mxu0 0.0
    %151 = vmatprep.subr.mxu0 0.0
    %152 = vmatpush1.msra.mxu0 0.0
    %153 = vmatprep.mubr.f32.mxu0 0.0
    %154 = vmatmul.mubr.f32.gmra.mrb[0].mxu0 %v87
    %v155 = vpop.f32.mrb[0].mxu0
    %v156 = vadd.f32 %v73, %v155
    %v157 = vpop.f32.mrb[0].mxu0
    %v158 = vadd.f32 %v77, %v157
    %159 = vdwg.mxu0
    %160 = vmatprep.subr.mxu0 0.0
    %161 = vmatpush1.msra.mxu0 %v58
    %162 = vmatprep.subr.mxu0 0.0
    %163 = vmatpush1.msra.mxu0 %v61
    %164 = vmatprep.subr.mxu0 0.0
    %165 = vmatpush1.msra.mxu0 %v64
    %166 = vmatprep.subr.mxu0 0.0
    %167 = vmatpush1.msra.mxu0 %v67
    %168 = vmatprep.subr.mxu0 0.0
    %169 = vmatpush1.msra.mxu0 0.0
    %170 = vmatprep.subr.mxu0 0.0
    %171 = vmatpush1.msra.mxu0 0.0
    %172 = vmatprep.subr.mxu0 0.0
    %173 = vmatpush1.msra.mxu0 0.0
    %174 = vmatprep.subr.mxu0 0.0
    %175 = vmatpush1.msra.mxu0 0.0
    %176 = vmatprep.subr.mxu0 0.0
    %177 = vmatpush1.msra.mxu0 0.0
    %178 = vmatprep.subr.mxu0 0.0
    %179 = vmatpush1.msra.mxu0 0.0
    %180 = vmatprep.subr.mxu0 0.0
    %181 = vmatpush1.msra.mxu0 0.0
    %182 = vmatprep.subr.mxu0 0.0
    %183 = vmatpush1.msra.mxu0 0.0
    %184 = vmatprep.subr.mxu0 0.0
    %185 = vmatpush1.msra.mxu0 0.0
    %186 = vmatprep.subr.mxu0 0.0
    %187 = vmatpush1.msra.mxu0 0.0
    %188 = vmatprep.subr.mxu0 0.0
    %189 = vmatpush1.msra.mxu0 0.0
    %190 = vmatprep.subr.mxu0 0.0
    %191 = vmatpush1.msra.mxu0 0.0
    %192 = vmatprep.subr.mxu0 0.0
    %193 = vmatpush1.msra.mxu0 0.0
    %194 = vmatprep.subr.mxu0 0.0
    %195 = vmatpush1.msra.mxu0 0.0
    %196 = vmatprep.subr.mxu0 0.0
    %197 = vmatpush1.msra.mxu0 0.0
    %198 = vmatprep.subr.mxu0 0.0
    %199 = vmatpush1.msra.mxu0 0.0
    %200 = vmatprep.subr.mxu0 0.0
    %201 = vmatpush1.msra.mxu0 0.0
    %202 = vmatprep.subr.mxu0 0.0
    %203 = vmatpush1.msra.mxu0 0.0
    %204 = vmatprep.subr.mxu0 0.0
    %205 = vmatpush1.msra.mxu0 0.0
    %206 = vmatprep.subr.mxu0 0.0
    %207 = vmatpush1.msra.mxu0 0.0
    %208 = vmatprep.subr.mxu0 0.0
    %209 = vmatpush1.msra.mxu0 0.0
    %210 = vmatprep.subr.mxu0 0.0
    %211 = vmatpush1.msra.mxu0 0.0
    %212 = vmatprep.subr.mxu0 0.0
    %213 = vmatpush1.msra.mxu0 0.0
    %214 = vmatprep.subr.mxu0 0.0
    %215 = vmatpush1.msra.mxu0 0.0
    %216 = vmatprep.subr.mxu0 0.0
    %217 = vmatpush1.msra.mxu0 0.0
    %218 = vmatprep.subr.mxu0 0.0
    %219 = vmatpush1.msra.mxu0 0.0
    %220 = vmatprep.subr.mxu0 0.0
    %221 = vmatpush1.msra.mxu0 0.0
    %222 = vmatprep.subr.mxu0 0.0
    %223 = vmatpush1.msra.mxu0 0.0
    %224 = vmatprep.mubr.f32.mxu0 0.0
    %225 = vmatmul.mubr.f32.gmra.mrb[0].mxu0 %v87
    %v226 = vpop.f32.mrb[0].mxu0
    %v227 = vadd.f32 %v81, %v226
    %v228 = vpop.f32.mrb[0].mxu0
    %229 = vdwg.mxu0
    %v230 = vld [vmem:[#allocation7] sm:$0xff]
    %v231 = vld [vmem:[#allocation7 + $0x8] sm:$0xff]
    %v232 = vld [vmem:[#allocation7 + $0x10] sm:$0xff]
    %v233 = vlaneseq
    %v234 = vand.u32 %v233, 127
    %v235 = vxor.u32 %v158, 2147483648
    %v236 = vmul.f32 %v235, 1.442695
    %v237 = vpow.pop %v236
    %v238 = vadd.f32 %v237, 1.0
    %v239 = vrcp.pop %v238
    %v240 = vmul.f32 1.0, %v239
    %v241 = vadd.f32 %v240, 1e-05
    %v242 = vmul.f32 %v241, %v230
    %v243 = vadd.f32 %v156, %v242
    %v244 = vmul.f32 %v241, %v241
    %v245 = vsub.f32 %v243, %v156
    %v246 = vmul.f32 %v245, %v245
    %v247 = vsub.f32 0.0, %v246
    %v248 = vmul.f32 %v244, 2.0
    %v249 = vrcp.pop %v248
    %v250 = vmul.f32 %v247, %v249
    %v251 = vlog2.pop %v241
    %v252 = vmul.f32 %v251, 0.6931472
    %v253 = vsub.f32 %v250, %v252
    %v254 = vsub.f32 %v253, 0.9189385
    %vm255 = vcmp.lt.s32.totalorder %v234, 3
    %v256 = vsel %vm255, %v254, 0.0
    %257 = vadd.xlane.f32.xlu0 %v256
    %v258 = vpop.xlane.xlu0 %257
    %vm259 = vcmp.eq.f32.partialorder %v231, 0.0
    %v260 = vsel %vm259, -1e+10, %v227
    %v261 = vadd.f32 %v260, %v232
    %262 = vmax.xlane.f32.xlu0 %v261
    %v263 = vpop.xlane.xlu0 %262
    %vm264 = vcmp.eq.f32.partialorder %v261, %v263
    %v265 = vsel %vm264, %v234, 128
    %v266 = vand.u32 %v265, 65535
    %v267 = vshra.s32 %v265, 16
    %v268 = vcvt.s32.f32 %v266
    %v269 = vcvt.s32.f32 %v267
    %270 = vmin.xlane.f32.xlu0 %v269
    %v271 = vpop.xlane.xlu0 %270
    %vm272 = vcmp.eq.f32.partialorder %v269, %v271
    %v273 = vsel %vm272, %v268, inf
    %274 = vmin.xlane.f32.xlu0 %v273
    %v275 = vpop.xlane.xlu0 %274
    %v276 = vcvt.f32.s32 %v275
    %v277 = vcvt.f32.s32 %v271
    %v278 = vshll.u32 %v277, 16
    %v279 = vadd.s32 %v278, %v276
    %280 = vmax.xlane.f32.xlu0 %v260
    %v281 = vpop.xlane.xlu0 %280
    %v282 = vsub.f32 %v260, %v281
    %v283 = vmul.f32 %v282, 1.442695
    %v284 = vpow.pop %v283
    %285 = vadd.xlane.f32.xlu0 %v284
    %v286 = vpop.xlane.xlu0 %285
    %v287 = vlog2.pop %v286
    %v288 = vmul.f32 %v287, 0.6931472
    %v289 = vadd.f32 %v281, %v288
    %vm290 = vcmp.eq.s32.totalorder %v234, %v279
    %v291 = vsel %vm290, %v260, 0.0
    %292 = vadd.xlane.f32.xlu0 %v291
    %v293 = vpop.xlane.xlu0 %292
    %v294 = vsub.f32 %v293, %v289
    %v295 = vsel %vm255, %v243, 0.0
    %vm296 = vcmp.eq.s32.totalorder %v234, 3
    %v297 = vsel %vm296, %v258, %v295
    %vm298 = vcmp.eq.s32.totalorder %v234, 4
    %v299 = vcvt.s32.f32 %v279
    %v300 = vsel %vm298, %v299, %v297
    %vm301 = vcmp.eq.s32.totalorder %v234, 5
    %v302 = vsel %vm301, %v294, %v300
    %303 = vst [vmem:[#allocation8] sm:$0xff] %v302
    // Predicated region
    $region30: #{tpu_custom_call.1} parent=1 // pred_check
      _
    $region31: #{tpu_custom_call.1} parent=1 // pred_check_branch
      %305 = sbr.rel (0) target = $region33
    $region32: #{tpu_custom_call.1} parent=1 // pred_region
      %s307 = ssub.s32 128, 128
      %308 = vsyncadd [#allocation4], %s307
      %s310 = sshll.u32 [#allocation8], 4
      %s311 = int_to_ptr.vmem [resolvable:$true] %s310
      %313 = dma.vmem_to_hbm [thread:$0]  %s311, 128, %s4, [#allocation4]
    $region33: #{tpu_custom_call.1} parent=1 // pred_fallthru
      _
    // Predicated region
    $region34: #{tpu_custom_call.1} parent=1 // pred_check
      _
    $region35: #{tpu_custom_call.1} parent=1 // pred_check_branch
      %315 = sbr.rel (0) target = $region37
    $region36: #{tpu_custom_call.1} parent=1 // pred_region
      %316 = dma.done [#allocation4], 128
    $region37: #{tpu_custom_call.1} parent=1 // pred_fallthru
      _
    %317 = vsyncpa [#allocation3], 1
    %318 = vsyncpa [#allocation6], 1
    %319 = vsyncpa [#allocation4], 1

</llo_original>
